<compile_context>
chip_gen: v7x
topology: tpu7x:2x2x1
jax: 0.10.0
libtpu: 0.0.40
codegen_flags: <defaults>
</compile_context>

<pallas_src>
import functools

import jax
import jax.numpy as jnp
from jax.experimental import pallas as pl
from jax.experimental.pallas import tpu as pltpu


def _round_up(x, m):
    return ((x + m - 1) // m) * m


def _choose_rows_per_group(h, w, max_lane=1024):
    """Rows packed per lane vector: maximize lane density, prefer small rg."""
    best_r = 1
    best_eff = w / _round_up(w, 128)
    r = 2
    while r <= h and r * w <= max_lane:
        if h % r == 0:
            eff = (r * w) / _round_up(r * w, 128)
            if eff > best_eff + 1e-9:
                best_r, best_eff = r, eff
        r += 1
    return best_r


def _choose_gblk(g_total, sub_mult, c_out, lane_row, prefer_split):
    """Row-group tile (sublane) size: divisor of g_total, multiple of sub_mult,
    capped so the live f32 accumulators stay around <= 64 KiB (no spills)."""
    if g_total <= sub_mult:
        return g_total
    lane_pad = _round_up(lane_row, 128)
    budget = (64 * 1024) // max(1, c_out * lane_pad * 4)
    cap = max(sub_mult, (budget // sub_mult) * sub_mult)
    cands = [d for d in range(sub_mult, g_total + 1, sub_mult)
             if g_total % d == 0 and d <= cap]
    if not cands:
        return g_total
    if prefer_split and len(cands) > 1 and cands[-1] == g_total:
        cands = cands[:-1]          # keep >= 2 steps on this axis when B == 1
    return max(cands)


def _gtu_kernel(w_ref, b_ref, x_ref, o_ref, *, k_taps):
    """1xK VALID conv as K*C_in*C_out scalar multiply-adds on the VPU.

    w_ref: SMEM (C_in*K*C_out,) f32, flat order (C_in, K, C_out)
    b_ref: SMEM (C_out,) f32
    x_ref: VMEM (C_in,  g_blk, lane_row)   -- lane_row = rg rows * W, lane-packed
    o_ref: VMEM (C_out, g_blk, lane_row)   -- lane-dense packed output
    """
    c_in, g_blk, lane_row = x_ref.shape
    c_out = o_ref.shape[0]

    # Bias-initialized f32 accumulators (one per output channel), held live.
    accs = [jnp.full((g_blk, lane_row), b_ref[co], dtype=jnp.float32)
            for co in range(c_out)]

    # Tiny static loops (C=4, K=3): fully unrolled at trace time.
    for ci in range(c_in):
        x_ci = x_ref[ci].astype(jnp.float32)          # one full-tile load / channel
        for k in range(k_taps):
            # tap k via an XLU roll; wrapped lanes only hit discarded columns.
            xk = x_ci if k == 0 else pltpu.roll(x_ci, lane_row - k, 1)
            base = (ci * k_taps + k) * c_out
            for co in range(c_out):
                accs[co] = accs[co] + w_ref[base + co] * xk

    for co in range(c_out):
        o_ref[co] = accs[co].astype(o_ref.dtype)


def gtu_forward(x_nchw, w_oihw, bias, *, time_strides):
    """Conv2d(C, C, kernel=(1, K), stride=(1, time_strides)), VALID padding.

    x_nchw: (B, C, H, W)   w_oihw: (C_out, C_in, 1, K)   bias: (C_out,)
    returns (B, C_out, H, W_out), matching the PyTorch GTU.forward.
    """
    B, C, H, W = x_nchw.shape
    C_out, C_in, kh, K = w_oihw.shape
    assert kh == 1 and C_in == C
    S = int(time_strides)
    assert S >= 1 and W >= K, "GTU requires W >= kernel_size and stride >= 1"
    W_out = (W - K) // S + 1

    # Lane packing: rg consecutive node rows share one lane vector (free
    # contiguous reshape of the NCHW tensor -- no HBM relayout).
    rg = _choose_rows_per_group(H, W)
    g_total = H // rg
    lane_row = rg * W

    itemsize = jnp.dtype(x_nchw.dtype).itemsize
    sub_mult = {4: 8, 2: 16, 1: 32}.get(itemsize, 8)
    g_blk = _choose_gblk(g_total, sub_mult, C_out, lane_row, prefer_split=(B < 2))

    x_in = x_nchw.reshape(B, C, g_total, lane_row)        # free (contiguous)

    # Weights -> flat scalars in SMEM, order (C_in, K, C_out); bias in SMEM.
    w_flat = jnp.transpose(w_oihw[:, :, 0, :], (1, 2, 0)).reshape(-1)
    w_flat = w_flat.astype(jnp.float32)
    bias_f = bias.astype(jnp.float32)

    lane_pad = _round_up(lane_row, 128)
    blk_bytes = (C + C_out) * g_blk * lane_pad * max(itemsize, 4)
    vmem_limit = int(min(64 * 1024 * 1024, max(2 * 1024 * 1024, 4 * blk_bytes)))

    kernel = functools.partial(_gtu_kernel, k_taps=K)

    out_full = pl.pallas_call(
        kernel,
        out_shape=jax.ShapeDtypeStruct((B, C_out, g_total, lane_row), x_nchw.dtype),
        grid=(B, g_total // g_blk),
        in_specs=[
            pl.BlockSpec(memory_space=pltpu.MemorySpace.SMEM),     # weights
            pl.BlockSpec(memory_space=pltpu.MemorySpace.SMEM),     # bias
            pl.BlockSpec((pl.Squeezed(), C, g_blk, lane_row),
                         lambda b, i: (b, 0, i, 0)),
        ],
        out_specs=pl.BlockSpec((pl.Squeezed(), C_out, g_blk, lane_row),
                               lambda b, i: (b, 0, i, 0)),
        compiler_params=pltpu.CompilerParams(
            dimension_semantics=("parallel", "parallel"),
            vmem_limit_bytes=vmem_limit,
        ),
    )(w_flat, bias_f, x_in)

    # Tiny glue: un-pack rows, keep valid (strided) output columns only.
    out = out_full.reshape(B, C_out, H, W)                 # free (contiguous)
    return out[:, :, :, : (W_out - 1) * S + 1 : S]


if __name__ == "__main__":
    # Small shapes consistent with the module: B=2, C=4, H=16 nodes, W=16 steps.
    B, C, H, W = 2, 4, 16, 16
    kernel_size = 3

    key = jax.random.PRNGKey(0)
    kx, kw, kb = jax.random.split(key, 3)

    x = jax.random.normal(kx, (B, C, H, W), dtype=jnp.float32)

    # Deterministic synthetic Conv2d params (same shapes as nn.Conv2d(C, C, (1, K))).
    fan_in = C * 1 * kernel_size
    bound = 1.0 / (fan_in ** 0.5)
    w_oihw = jax.random.uniform(
        kw, (C, C, 1, kernel_size), dtype=jnp.float32, minval=-bound, maxval=bound)
    bias = jax.random.uniform(
        kb, (C,), dtype=jnp.float32, minval=-bound, maxval=bound)

    def ref_conv(xx, s):
        return jax.lax.conv_general_dilated(
            xx, w_oihw, window_strides=(1, s), padding="VALID",
            dimension_numbers=("NCHW", "OIHW", "NCHW"),
        ) + bias[None, :, None, None]

    # stride=1 and stride=2 paths (same kernel; stride handled by output slice).
    for s in (1, 2):
        out = jax.block_until_ready(gtu_forward(x, w_oihw, bias, time_strides=s))
        ref = ref_conv(x, s)
        assert out.shape == ref.shape, (s, out.shape, ref.shape)
        assert jnp.allclose(out, ref, atol=1e-5, rtol=1e-5), s

    print("KERNEL_OK")
</pallas_src>

<mosaic_0001>
module attributes {stable_mosaic.version = 11 : i64} {
  func.func @_gtu_kernel(%arg0: i32, %arg1: i32, %arg2: memref<48xf32, #tpu.memory_space<smem>>, %arg3: memref<4xf32, #tpu.memory_space<smem>>, %arg4: memref<1x4x2x128xf32, #tpu.memory_space<vmem>>, %arg5: memref<1x4x2x128xf32, #tpu.memory_space<vmem>>) attributes {dimension_semantics = [#tpu.dimension_semantics<parallel>, #tpu.dimension_semantics<parallel>], iteration_bounds = array<i64: 2, 1>, scalar_prefetch = 0 : i64, scratch_operands = 0 : i64, tpu.core_type = #tpu.core_type<tc>, window_params = [{transform_indices = @transform_0, window_bounds = array<i64: 48>}, {transform_indices = @transform_1, window_bounds = array<i64: 4>}, {transform_indices = @transform_2, window_bounds = array<i64: 1, 4, 2, 128>}, {transform_indices = @transform_3, window_bounds = array<i64: 1, 4, 2, 128>}]} {
    %c0 = arith.constant 0 : index
    %0 = memref.load %arg3[%c0] : memref<4xf32, #tpu.memory_space<smem>>
    %1 = vector.broadcast %0 : f32 to vector<2x128xf32>
    %c1 = arith.constant 1 : index
    %2 = memref.load %arg3[%c1] : memref<4xf32, #tpu.memory_space<smem>>
    %3 = vector.broadcast %2 : f32 to vector<2x128xf32>
    %c2 = arith.constant 2 : index
    %4 = memref.load %arg3[%c2] : memref<4xf32, #tpu.memory_space<smem>>
    %5 = vector.broadcast %4 : f32 to vector<2x128xf32>
    %c3 = arith.constant 3 : index
    %6 = memref.load %arg3[%c3] : memref<4xf32, #tpu.memory_space<smem>>
    %7 = vector.broadcast %6 : f32 to vector<2x128xf32>
    %c0_0 = arith.constant 0 : index
    %c0_1 = arith.constant 0 : index
    %c0_2 = arith.constant 0 : index
    %c0_3 = arith.constant 0 : index
    %8 = vector.load %arg4[%c0_0, %c0_1, %c0_2, %c0_3] : memref<1x4x2x128xf32, #tpu.memory_space<vmem>>, vector<1x1x2x128xf32>
    %9 = vector.shape_cast %8 : vector<1x1x2x128xf32> to vector<2x128xf32>
    %c0_4 = arith.constant 0 : index
    %10 = memref.load %arg2[%c0_4] : memref<48xf32, #tpu.memory_space<smem>>
    %11 = vector.broadcast %10 : f32 to vector<2x128xf32>
    %12 = arith.mulf %11, %9 : vector<2x128xf32>
    %13 = arith.addf %1, %12 : vector<2x128xf32>
    %c1_5 = arith.constant 1 : index
    %14 = memref.load %arg2[%c1_5] : memref<48xf32, #tpu.memory_space<smem>>
    %15 = vector.broadcast %14 : f32 to vector<2x128xf32>
    %16 = arith.mulf %15, %9 : vector<2x128xf32>
    %17 = arith.addf %3, %16 : vector<2x128xf32>
    %c2_6 = arith.constant 2 : index
    %18 = memref.load %arg2[%c2_6] : memref<48xf32, #tpu.memory_space<smem>>
    %19 = vector.broadcast %18 : f32 to vector<2x128xf32>
    %20 = arith.mulf %19, %9 : vector<2x128xf32>
    %21 = arith.addf %5, %20 : vector<2x128xf32>
    %c3_7 = arith.constant 3 : index
    %22 = memref.load %arg2[%c3_7] : memref<48xf32, #tpu.memory_space<smem>>
    %23 = vector.broadcast %22 : f32 to vector<2x128xf32>
    %24 = arith.mulf %23, %9 : vector<2x128xf32>
    %25 = arith.addf %7, %24 : vector<2x128xf32>
    %c127_i32 = arith.constant 127 : i32
    %26 = tpu.dynamic_rotate %9 by %c127_i32 dim 1 : vector<2x128xf32>, i32 -> vector<2x128xf32>
    %c4 = arith.constant 4 : index
    %27 = memref.load %arg2[%c4] : memref<48xf32, #tpu.memory_space<smem>>
    %28 = vector.broadcast %27 : f32 to vector<2x128xf32>
    %29 = arith.mulf %28, %26 : vector<2x128xf32>
    %30 = arith.addf %13, %29 : vector<2x128xf32>
    %c5 = arith.constant 5 : index
    %31 = memref.load %arg2[%c5] : memref<48xf32, #tpu.memory_space<smem>>
    %32 = vector.broadcast %31 : f32 to vector<2x128xf32>
    %33 = arith.mulf %32, %26 : vector<2x128xf32>
    %34 = arith.addf %17, %33 : vector<2x128xf32>
    %c6 = arith.constant 6 : index
    %35 = memref.load %arg2[%c6] : memref<48xf32, #tpu.memory_space<smem>>
    %36 = vector.broadcast %35 : f32 to vector<2x128xf32>
    %37 = arith.mulf %36, %26 : vector<2x128xf32>
    %38 = arith.addf %21, %37 : vector<2x128xf32>
    %c7 = arith.constant 7 : index
    %39 = memref.load %arg2[%c7] : memref<48xf32, #tpu.memory_space<smem>>
    %40 = vector.broadcast %39 : f32 to vector<2x128xf32>
    %41 = arith.mulf %40, %26 : vector<2x128xf32>
    %42 = arith.addf %25, %41 : vector<2x128xf32>
    %c126_i32 = arith.constant 126 : i32
    %43 = tpu.dynamic_rotate %9 by %c126_i32 dim 1 : vector<2x128xf32>, i32 -> vector<2x128xf32>
    %c8 = arith.constant 8 : index
    %44 = memref.load %arg2[%c8] : memref<48xf32, #tpu.memory_space<smem>>
    %45 = vector.broadcast %44 : f32 to vector<2x128xf32>
    %46 = arith.mulf %45, %43 : vector<2x128xf32>
    %47 = arith.addf %30, %46 : vector<2x128xf32>
    %c9 = arith.constant 9 : index
    %48 = memref.load %arg2[%c9] : memref<48xf32, #tpu.memory_space<smem>>
    %49 = vector.broadcast %48 : f32 to vector<2x128xf32>
    %50 = arith.mulf %49, %43 : vector<2x128xf32>
    %51 = arith.addf %34, %50 : vector<2x128xf32>
    %c10 = arith.constant 10 : index
    %52 = memref.load %arg2[%c10] : memref<48xf32, #tpu.memory_space<smem>>
    %53 = vector.broadcast %52 : f32 to vector<2x128xf32>
    %54 = arith.mulf %53, %43 : vector<2x128xf32>
    %55 = arith.addf %38, %54 : vector<2x128xf32>
    %c11 = arith.constant 11 : index
    %56 = memref.load %arg2[%c11] : memref<48xf32, #tpu.memory_space<smem>>
    %57 = vector.broadcast %56 : f32 to vector<2x128xf32>
    %58 = arith.mulf %57, %43 : vector<2x128xf32>
    %59 = arith.addf %42, %58 : vector<2x128xf32>
    %c0_8 = arith.constant 0 : index
    %c1_9 = arith.constant 1 : index
    %c0_10 = arith.constant 0 : index
    %c0_11 = arith.constant 0 : index
    %60 = vector.load %arg4[%c0_8, %c1_9, %c0_10, %c0_11] : memref<1x4x2x128xf32, #tpu.memory_space<vmem>>, vector<1x1x2x128xf32>
    %61 = vector.shape_cast %60 : vector<1x1x2x128xf32> to vector<2x128xf32>
    %c12 = arith.constant 12 : index
    %62 = memref.load %arg2[%c12] : memref<48xf32, #tpu.memory_space<smem>>
    %63 = vector.broadcast %62 : f32 to vector<2x128xf32>
    %64 = arith.mulf %63, %61 : vector<2x128xf32>
    %65 = arith.addf %47, %64 : vector<2x128xf32>
    %c13 = arith.constant 13 : index
    %66 = memref.load %arg2[%c13] : memref<48xf32, #tpu.memory_space<smem>>
    %67 = vector.broadcast %66 : f32 to vector<2x128xf32>
    %68 = arith.mulf %67, %61 : vector<2x128xf32>
    %69 = arith.addf %51, %68 : vector<2x128xf32>
    %c14 = arith.constant 14 : index
    %70 = memref.load %arg2[%c14] : memref<48xf32, #tpu.memory_space<smem>>
    %71 = vector.broadcast %70 : f32 to vector<2x128xf32>
    %72 = arith.mulf %71, %61 : vector<2x128xf32>
    %73 = arith.addf %55, %72 : vector<2x128xf32>
    %c15 = arith.constant 15 : index
    %74 = memref.load %arg2[%c15] : memref<48xf32, #tpu.memory_space<smem>>
    %75 = vector.broadcast %74 : f32 to vector<2x128xf32>
    %76 = arith.mulf %75, %61 : vector<2x128xf32>
    %77 = arith.addf %59, %76 : vector<2x128xf32>
    %c127_i32_12 = arith.constant 127 : i32
    %78 = tpu.dynamic_rotate %61 by %c127_i32_12 dim 1 : vector<2x128xf32>, i32 -> vector<2x128xf32>
    %c16 = arith.constant 16 : index
    %79 = memref.load %arg2[%c16] : memref<48xf32, #tpu.memory_space<smem>>
    %80 = vector.broadcast %79 : f32 to vector<2x128xf32>
    %81 = arith.mulf %80, %78 : vector<2x128xf32>
    %82 = arith.addf %65, %81 : vector<2x128xf32>
    %c17 = arith.constant 17 : index
    %83 = memref.load %arg2[%c17] : memref<48xf32, #tpu.memory_space<smem>>
    %84 = vector.broadcast %83 : f32 to vector<2x128xf32>
    %85 = arith.mulf %84, %78 : vector<2x128xf32>
    %86 = arith.addf %69, %85 : vector<2x128xf32>
    %c18 = arith.constant 18 : index
    %87 = memref.load %arg2[%c18] : memref<48xf32, #tpu.memory_space<smem>>
    %88 = vector.broadcast %87 : f32 to vector<2x128xf32>
    %89 = arith.mulf %88, %78 : vector<2x128xf32>
    %90 = arith.addf %73, %89 : vector<2x128xf32>
    %c19 = arith.constant 19 : index
    %91 = memref.load %arg2[%c19] : memref<48xf32, #tpu.memory_space<smem>>
    %92 = vector.broadcast %91 : f32 to vector<2x128xf32>
    %93 = arith.mulf %92, %78 : vector<2x128xf32>
    %94 = arith.addf %77, %93 : vector<2x128xf32>
    %c126_i32_13 = arith.constant 126 : i32
    %95 = tpu.dynamic_rotate %61 by %c126_i32_13 dim 1 : vector<2x128xf32>, i32 -> vector<2x128xf32>
    %c20 = arith.constant 20 : index
    %96 = memref.load %arg2[%c20] : memref<48xf32, #tpu.memory_space<smem>>
    %97 = vector.broadcast %96 : f32 to vector<2x128xf32>
    %98 = arith.mulf %97, %95 : vector<2x128xf32>
    %99 = arith.addf %82, %98 : vector<2x128xf32>
    %c21 = arith.constant 21 : index
    %100 = memref.load %arg2[%c21] : memref<48xf32, #tpu.memory_space<smem>>
    %101 = vector.broadcast %100 : f32 to vector<2x128xf32>
    %102 = arith.mulf %101, %95 : vector<2x128xf32>
    %103 = arith.addf %86, %102 : vector<2x128xf32>
    %c22 = arith.constant 22 : index
    %104 = memref.load %arg2[%c22] : memref<48xf32, #tpu.memory_space<smem>>
    %105 = vector.broadcast %104 : f32 to vector<2x128xf32>
    %106 = arith.mulf %105, %95 : vector<2x128xf32>
    %107 = arith.addf %90, %106 : vector<2x128xf32>
    %c23 = arith.constant 23 : index
    %108 = memref.load %arg2[%c23] : memref<48xf32, #tpu.memory_space<smem>>
    %109 = vector.broadcast %108 : f32 to vector<2x128xf32>
    %110 = arith.mulf %109, %95 : vector<2x128xf32>
    %111 = arith.addf %94, %110 : vector<2x128xf32>
    %c0_14 = arith.constant 0 : index
    %c2_15 = arith.constant 2 : index
    %c0_16 = arith.constant 0 : index
    %c0_17 = arith.constant 0 : index
    %112 = vector.load %arg4[%c0_14, %c2_15, %c0_16, %c0_17] : memref<1x4x2x128xf32, #tpu.memory_space<vmem>>, vector<1x1x2x128xf32>
    %113 = vector.shape_cast %112 : vector<1x1x2x128xf32> to vector<2x128xf32>
    %c24 = arith.constant 24 : index
    %114 = memref.load %arg2[%c24] : memref<48xf32, #tpu.memory_space<smem>>
    %115 = vector.broadcast %114 : f32 to vector<2x128xf32>
    %116 = arith.mulf %115, %113 : vector<2x128xf32>
    %117 = arith.addf %99, %116 : vector<2x128xf32>
    %c25 = arith.constant 25 : index
    %118 = memref.load %arg2[%c25] : memref<48xf32, #tpu.memory_space<smem>>
    %119 = vector.broadcast %118 : f32 to vector<2x128xf32>
    %120 = arith.mulf %119, %113 : vector<2x128xf32>
    %121 = arith.addf %103, %120 : vector<2x128xf32>
    %c26 = arith.constant 26 : index
    %122 = memref.load %arg2[%c26] : memref<48xf32, #tpu.memory_space<smem>>
    %123 = vector.broadcast %122 : f32 to vector<2x128xf32>
    %124 = arith.mulf %123, %113 : vector<2x128xf32>
    %125 = arith.addf %107, %124 : vector<2x128xf32>
    %c27 = arith.constant 27 : index
    %126 = memref.load %arg2[%c27] : memref<48xf32, #tpu.memory_space<smem>>
    %127 = vector.broadcast %126 : f32 to vector<2x128xf32>
    %128 = arith.mulf %127, %113 : vector<2x128xf32>
    %129 = arith.addf %111, %128 : vector<2x128xf32>
    %c127_i32_18 = arith.constant 127 : i32
    %130 = tpu.dynamic_rotate %113 by %c127_i32_18 dim 1 : vector<2x128xf32>, i32 -> vector<2x128xf32>
    %c28 = arith.constant 28 : index
    %131 = memref.load %arg2[%c28] : memref<48xf32, #tpu.memory_space<smem>>
    %132 = vector.broadcast %131 : f32 to vector<2x128xf32>
    %133 = arith.mulf %132, %130 : vector<2x128xf32>
    %134 = arith.addf %117, %133 : vector<2x128xf32>
    %c29 = arith.constant 29 : index
    %135 = memref.load %arg2[%c29] : memref<48xf32, #tpu.memory_space<smem>>
    %136 = vector.broadcast %135 : f32 to vector<2x128xf32>
    %137 = arith.mulf %136, %130 : vector<2x128xf32>
    %138 = arith.addf %121, %137 : vector<2x128xf32>
    %c30 = arith.constant 30 : index
    %139 = memref.load %arg2[%c30] : memref<48xf32, #tpu.memory_space<smem>>
    %140 = vector.broadcast %139 : f32 to vector<2x128xf32>
    %141 = arith.mulf %140, %130 : vector<2x128xf32>
    %142 = arith.addf %125, %141 : vector<2x128xf32>
    %c31 = arith.constant 31 : index
    %143 = memref.load %arg2[%c31] : memref<48xf32, #tpu.memory_space<smem>>
    %144 = vector.broadcast %143 : f32 to vector<2x128xf32>
    %145 = arith.mulf %144, %130 : vector<2x128xf32>
    %146 = arith.addf %129, %145 : vector<2x128xf32>
    %c126_i32_19 = arith.constant 126 : i32
    %147 = tpu.dynamic_rotate %113 by %c126_i32_19 dim 1 : vector<2x128xf32>, i32 -> vector<2x128xf32>
    %c32 = arith.constant 32 : index
    %148 = memref.load %arg2[%c32] : memref<48xf32, #tpu.memory_space<smem>>
    %149 = vector.broadcast %148 : f32 to vector<2x128xf32>
    %150 = arith.mulf %149, %147 : vector<2x128xf32>
    %151 = arith.addf %134, %150 : vector<2x128xf32>
    %c33 = arith.constant 33 : index
    %152 = memref.load %arg2[%c33] : memref<48xf32, #tpu.memory_space<smem>>
    %153 = vector.broadcast %152 : f32 to vector<2x128xf32>
    %154 = arith.mulf %153, %147 : vector<2x128xf32>
    %155 = arith.addf %138, %154 : vector<2x128xf32>
    %c34 = arith.constant 34 : index
    %156 = memref.load %arg2[%c34] : memref<48xf32, #tpu.memory_space<smem>>
    %157 = vector.broadcast %156 : f32 to vector<2x128xf32>
    %158 = arith.mulf %157, %147 : vector<2x128xf32>
    %159 = arith.addf %142, %158 : vector<2x128xf32>
    %c35 = arith.constant 35 : index
    %160 = memref.load %arg2[%c35] : memref<48xf32, #tpu.memory_space<smem>>
    %161 = vector.broadcast %160 : f32 to vector<2x128xf32>
    %162 = arith.mulf %161, %147 : vector<2x128xf32>
    %163 = arith.addf %146, %162 : vector<2x128xf32>
    %c0_20 = arith.constant 0 : index
    %c3_21 = arith.constant 3 : index
    %c0_22 = arith.constant 0 : index
    %c0_23 = arith.constant 0 : index
    %164 = vector.load %arg4[%c0_20, %c3_21, %c0_22, %c0_23] : memref<1x4x2x128xf32, #tpu.memory_space<vmem>>, vector<1x1x2x128xf32>
    %165 = vector.shape_cast %164 : vector<1x1x2x128xf32> to vector<2x128xf32>
    %c36 = arith.constant 36 : index
    %166 = memref.load %arg2[%c36] : memref<48xf32, #tpu.memory_space<smem>>
    %167 = vector.broadcast %166 : f32 to vector<2x128xf32>
    %168 = arith.mulf %167, %165 : vector<2x128xf32>
    %169 = arith.addf %151, %168 : vector<2x128xf32>
    %c37 = arith.constant 37 : index
    %170 = memref.load %arg2[%c37] : memref<48xf32, #tpu.memory_space<smem>>
    %171 = vector.broadcast %170 : f32 to vector<2x128xf32>
    %172 = arith.mulf %171, %165 : vector<2x128xf32>
    %173 = arith.addf %155, %172 : vector<2x128xf32>
    %c38 = arith.constant 38 : index
    %174 = memref.load %arg2[%c38] : memref<48xf32, #tpu.memory_space<smem>>
    %175 = vector.broadcast %174 : f32 to vector<2x128xf32>
    %176 = arith.mulf %175, %165 : vector<2x128xf32>
    %177 = arith.addf %159, %176 : vector<2x128xf32>
    %c39 = arith.constant 39 : index
    %178 = memref.load %arg2[%c39] : memref<48xf32, #tpu.memory_space<smem>>
    %179 = vector.broadcast %178 : f32 to vector<2x128xf32>
    %180 = arith.mulf %179, %165 : vector<2x128xf32>
    %181 = arith.addf %163, %180 : vector<2x128xf32>
    %c127_i32_24 = arith.constant 127 : i32
    %182 = tpu.dynamic_rotate %165 by %c127_i32_24 dim 1 : vector<2x128xf32>, i32 -> vector<2x128xf32>
    %c40 = arith.constant 40 : index
    %183 = memref.load %arg2[%c40] : memref<48xf32, #tpu.memory_space<smem>>
    %184 = vector.broadcast %183 : f32 to vector<2x128xf32>
    %185 = arith.mulf %184, %182 : vector<2x128xf32>
    %186 = arith.addf %169, %185 : vector<2x128xf32>
    %c41 = arith.constant 41 : index
    %187 = memref.load %arg2[%c41] : memref<48xf32, #tpu.memory_space<smem>>
    %188 = vector.broadcast %187 : f32 to vector<2x128xf32>
    %189 = arith.mulf %188, %182 : vector<2x128xf32>
    %190 = arith.addf %173, %189 : vector<2x128xf32>
    %c42 = arith.constant 42 : index
    %191 = memref.load %arg2[%c42] : memref<48xf32, #tpu.memory_space<smem>>
    %192 = vector.broadcast %191 : f32 to vector<2x128xf32>
    %193 = arith.mulf %192, %182 : vector<2x128xf32>
    %194 = arith.addf %177, %193 : vector<2x128xf32>
    %c43 = arith.constant 43 : index
    %195 = memref.load %arg2[%c43] : memref<48xf32, #tpu.memory_space<smem>>
    %196 = vector.broadcast %195 : f32 to vector<2x128xf32>
    %197 = arith.mulf %196, %182 : vector<2x128xf32>
    %198 = arith.addf %181, %197 : vector<2x128xf32>
    %c126_i32_25 = arith.constant 126 : i32
    %199 = tpu.dynamic_rotate %165 by %c126_i32_25 dim 1 : vector<2x128xf32>, i32 -> vector<2x128xf32>
    %c44 = arith.constant 44 : index
    %200 = memref.load %arg2[%c44] : memref<48xf32, #tpu.memory_space<smem>>
    %201 = vector.broadcast %200 : f32 to vector<2x128xf32>
    %202 = arith.mulf %201, %199 : vector<2x128xf32>
    %203 = arith.addf %186, %202 : vector<2x128xf32>
    %c45 = arith.constant 45 : index
    %204 = memref.load %arg2[%c45] : memref<48xf32, #tpu.memory_space<smem>>
    %205 = vector.broadcast %204 : f32 to vector<2x128xf32>
    %206 = arith.mulf %205, %199 : vector<2x128xf32>
    %207 = arith.addf %190, %206 : vector<2x128xf32>
    %c46 = arith.constant 46 : index
    %208 = memref.load %arg2[%c46] : memref<48xf32, #tpu.memory_space<smem>>
    %209 = vector.broadcast %208 : f32 to vector<2x128xf32>
    %210 = arith.mulf %209, %199 : vector<2x128xf32>
    %211 = arith.addf %194, %210 : vector<2x128xf32>
    %c47 = arith.constant 47 : index
    %212 = memref.load %arg2[%c47] : memref<48xf32, #tpu.memory_space<smem>>
    %213 = vector.broadcast %212 : f32 to vector<2x128xf32>
    %214 = arith.mulf %213, %199 : vector<2x128xf32>
    %215 = arith.addf %198, %214 : vector<2x128xf32>
    %c0_26 = arith.constant 0 : index
    %c0_27 = arith.constant 0 : index
    %c0_28 = arith.constant 0 : index
    %c0_29 = arith.constant 0 : index
    %216 = vector.load %arg5[%c0_26, %c0_27, %c0_28, %c0_29] : memref<1x4x2x128xf32, #tpu.memory_space<vmem>>, vector<1x1x2x128xf32>
    %217 = vector.shape_cast %216 : vector<1x1x2x128xf32> to vector<2x128xf32>
    %218 = vector.shape_cast %203 : vector<2x128xf32> to vector<1x1x2x128xf32>
    tpu.vector_store %arg5[%c0_26, %c0_27, %c0_28, %c0_29], %218 {strides = array<i32>} : memref<1x4x2x128xf32, #tpu.memory_space<vmem>>, vector<1x1x2x128xf32>,
    %c0_30 = arith.constant 0 : index
    %c1_31 = arith.constant 1 : index
    %c0_32 = arith.constant 0 : index
    %c0_33 = arith.constant 0 : index
    %219 = vector.load %arg5[%c0_30, %c1_31, %c0_32, %c0_33] : memref<1x4x2x128xf32, #tpu.memory_space<vmem>>, vector<1x1x2x128xf32>
    %220 = vector.shape_cast %219 : vector<1x1x2x128xf32> to vector<2x128xf32>
    %221 = vector.shape_cast %207 : vector<2x128xf32> to vector<1x1x2x128xf32>
    tpu.vector_store %arg5[%c0_30, %c1_31, %c0_32, %c0_33], %221 {strides = array<i32>} : memref<1x4x2x128xf32, #tpu.memory_space<vmem>>, vector<1x1x2x128xf32>,
    %c0_34 = arith.constant 0 : index
    %c2_35 = arith.constant 2 : index
    %c0_36 = arith.constant 0 : index
    %c0_37 = arith.constant 0 : index
    %222 = vector.load %arg5[%c0_34, %c2_35, %c0_36, %c0_37] : memref<1x4x2x128xf32, #tpu.memory_space<vmem>>, vector<1x1x2x128xf32>
    %223 = vector.shape_cast %222 : vector<1x1x2x128xf32> to vector<2x128xf32>
    %224 = vector.shape_cast %211 : vector<2x128xf32> to vector<1x1x2x128xf32>
    tpu.vector_store %arg5[%c0_34, %c2_35, %c0_36, %c0_37], %224 {strides = array<i32>} : memref<1x4x2x128xf32, #tpu.memory_space<vmem>>, vector<1x1x2x128xf32>,
    %c0_38 = arith.constant 0 : index
    %c3_39 = arith.constant 3 : index
    %c0_40 = arith.constant 0 : index
    %c0_41 = arith.constant 0 : index
    %225 = vector.load %arg5[%c0_38, %c3_39, %c0_40, %c0_41] : memref<1x4x2x128xf32, #tpu.memory_space<vmem>>, vector<1x1x2x128xf32>
    %226 = vector.shape_cast %225 : vector<1x1x2x128xf32> to vector<2x128xf32>
    %227 = vector.shape_cast %215 : vector<2x128xf32> to vector<1x1x2x128xf32>
    tpu.vector_store %arg5[%c0_38, %c3_39, %c0_40, %c0_41], %227 {strides = array<i32>} : memref<1x4x2x128xf32, #tpu.memory_space<vmem>>, vector<1x1x2x128xf32>,
    return
  }
  func.func @transform_0(%arg0: i32, %arg1: i32) -> i32 {
    %c0_i32 = arith.constant 0 : i32
    %c0_i32_0 = arith.constant 0 : i32
    return %c0_i32 : i32
  }
  func.func @transform_1(%arg0: i32, %arg1: i32) -> i32 {
    %c0_i32 = arith.constant 0 : i32
    %c0_i32_0 = arith.constant 0 : i32
    return %c0_i32 : i32
  }
  func.func @transform_2(%arg0: i32, %arg1: i32) -> (i32, i32, i32, i32) {
    %c0_i32 = arith.constant 0 : i32
    %c0_i32_0 = arith.constant 0 : i32
    %c0_i32_1 = arith.constant 0 : i32
    return %arg0, %c0_i32, %arg1, %c0_i32_0 : i32, i32, i32, i32
  }
  func.func @transform_3(%arg0: i32, %arg1: i32) -> (i32, i32, i32, i32) {
    %c0_i32 = arith.constant 0 : i32
    %c0_i32_0 = arith.constant 0 : i32
    %c0_i32_1 = arith.constant 0 : i32
    return %arg0, %c0_i32, %arg1, %c0_i32_0 : i32, i32, i32, i32
  }
}

</mosaic_0001>

<llo_original>
// kernel: tpu_custom_call.1
$region0: #{tpu_custom_call.1}
  #allocation0 [shape = 'u32[]', space=smem, size = 0x4, offset = 0x4, fixed_abs, tag = 'smem constant byte address 0x4 - core index']
  #allocation1 [shape = 'u32[144,128]{1,0:T(1,128)}', space=vmem, size = 0x12000, scoped, tag = 'internal scratch']
  %s0 = inlined_call_operand.hbm [shape: f32[48], index: 0, kind: input, shape index: {}]
  %s1 = inlined_call_operand.vmem [shape: f32[4], index: 1, kind: input, shape index: {}]
  %s2 = inlined_call_operand.hbm [shape: f32[2,4,2,128], index: 2, kind: input, shape index: {}]
  %s3 = inlined_call_operand.hbm [shape: f32[2,4,2,128], index: 3, kind: output, shape index: {}]
  %s4 = sld [smem:[#allocation0]]
  $region57: #{tpu_custom_call.1} parent=0
    _
  %s6 = ssub.s32 1, %s4
  %s7 = scalar_select 0, %s6, %s4
  $region1: #{tpu_custom_call.1} parent=0
    #allocation2 [shape = 'u8[512]{0}', space=smem, size = 0x200, scoped, tag = 'input window, operand 0, single buffered']
    #allocation3 [shape = 's32[2]{0}', space=sflag, size = 0x8, scoped, tag = 'scoped memory for tpu_custom_call.1']
    #allocation4 [shape = 's32[2]{0}', space=sflag, size = 0x8, scoped, tag = 'scoped memory for tpu_custom_call.1']
    #allocation5 [shape = 's32[2]{0}', space=sflag, size = 0x8, scoped, tag = 'scoped memory for tpu_custom_call.1']
    #allocation6 [shape = 's32[2]{0}', space=sflag, size = 0x8, scoped, tag = 'scoped memory for tpu_custom_call.1']
    #allocation7 [shape = 'u8[512]{0}', space=smem, size = 0x200, scoped, tag = 'input window, operand 1, single buffered']
    #allocation8 [shape = 'u8[8192]{0}', space=vmem, size = 0x2000, scoped, tag = 'input window, operand 2']
    #allocation9 [shape = 'u8[8192]{0}', space=vmem, size = 0x2000, scoped, tag = 'output window, operand 0']
    %8 = vsyncpa [#allocation5], 0
    %9 = vsyncpa [#allocation6], 0
    %10 = vsyncpa [#allocation3], 0
    %s11 = scalar_lea.sflag [#allocation3], 1
    %12 = vsyncpa %s11, 0
    %13 = vsyncpa [#allocation4], 0
    %s14 = scalar_lea.sflag [#allocation4], 1
    %15 = vsyncpa %s14, 0
    loop: start=0, step=1, limit=4
    $region2: #{tpu_custom_call.1} parent=1 // loop_pre_header
      _
    $region3: #{tpu_custom_call.1} parent=1 // loop_header
      %s17 = sphi 0, %s21
      %p18 = scmp.ge.s32.totalorder %s17, 4
      %s24 = sphi 0, %s36
      %s25 = sphi 0, %s32
      %s26 = sphi 0, %s24
      %s27 = sphi 0, %s25
      %s28 = sphi 0, %s26
      %s29 = sphi 0, %s27
      %s37 = sphi 0, %s37
      %s39 = sphi 0, %s37
      %s40 = sphi 0, %s39
      %s54 = sphi 0, %s40
      %s58 = sphi 0, %s58
      %s60 = sphi 0, %s58
      %s61 = sphi 0, %s60
      %s75 = sphi 0, %s61
      %s83 = sphi 0, %s85
      %s86 = sphi 0, %s83
      %s87 = sphi 0, %s86
      %s103 = sphi 0, %s87
      %s111 = sphi 0, %s113
      %s114 = sphi 0, %s111
      %s115 = sphi 0, %s114
      %s131 = sphi 0, %s115
    $region4: #{tpu_custom_call.1} parent=1 // loop_header_branch
      %20 = sbr.rel (%p18) target = $region8
    $region5: #{tpu_custom_call.1} parent=1 // loop_body
      %s22 = ssub.s32 %s17, 1
      %s23 = ssub.s32 %s17, 2
      %s30 = sadd.s32 1, %s25
      %p31 = scmp.ge.s32.totalorder %s30, 1
      %s32 = scalar_select %p31, 0, %s30
      %s33 = sadd.s32 1, %s24
      %s34 = scalar_select %p31, %s33, %s24
      %p35 = scmp.ge.s32.totalorder %s34, 2
      %s36 = scalar_select %p35, 0, %s34
      %s38 = sadd.s32 %s37, 1
      %p41 = scmp.eq.s32.totalorder %s17, 1
      %p42 = scmp.ne.s32.totalorder %s37, %s39
      %p43 = scmp.eq.s32.totalorder %s17, 0
      %p44 = por %p42, %p43
      %p45 = scmp.ne.s32.totalorder %s37, %s39
      %p46 = scmp.eq.s32.totalorder %s22, 1
      %p47 = por %p45, %p46
      %p48 = scmp.ne.s32.totalorder %s39, %s40
      %p49 = scmp.eq.s32.totalorder %s22, 0
      %p50 = por %p48, %p49
      %p51 = scmp.ne.s32.totalorder %s39, %s40
      %p52 = scmp.eq.s32.totalorder %s23, 1
      %p53 = por %p51, %p52
      %p55 = scmp.ne.s32.totalorder %s40, %s54
      %p56 = scmp.eq.s32.totalorder %s23, 0
      %p57 = por %p55, %p56
      %s59 = sadd.s32 %s58, 1
      %p62 = scmp.eq.s32.totalorder %s17, 1
      %p63 = scmp.ne.s32.totalorder %s58, %s60
      %p64 = scmp.eq.s32.totalorder %s17, 0
      %p65 = por %p63, %p64
      %p66 = scmp.ne.s32.totalorder %s58, %s60
      %p67 = scmp.eq.s32.totalorder %s22, 1
      %p68 = por %p66, %p67
      %p69 = scmp.ne.s32.totalorder %s60, %s61
      %p70 = scmp.eq.s32.totalorder %s22, 0
      %p71 = por %p69, %p70
      %p72 = scmp.ne.s32.totalorder %s60, %s61
      %p73 = scmp.eq.s32.totalorder %s23, 1
      %p74 = por %p72, %p73
      %p76 = scmp.ne.s32.totalorder %s61, %s75
      %p77 = scmp.eq.s32.totalorder %s23, 0
      %p78 = por %p76, %p77
      %s79 = ssub.s32 %s24, %s36
      %s80 = ssub.s32 %s25, %s32
      %s81 = sor.u32 %s79, %s80
      %p82 = scmp.eq.s32.totalorder %s81, 0
      %s84 = sadd.s32 %s83, 1
      %s85 = scalar_select %p82, %s83, %s84
      %p88 = pneg %p82
      %p89 = scmp.eq.s32.totalorder %s17, 1
      %p90 = por %p88, %p89
      %p91 = scmp.ne.s32.totalorder %s83, %s86
      %p92 = scmp.eq.s32.totalorder %s17, 0
      %p93 = por %p91, %p92
      %p94 = scmp.ne.s32.totalorder %s83, %s86
      %p95 = scmp.eq.s32.totalorder %s22, 1
      %p96 = por %p94, %p95
      %p97 = scmp.ne.s32.totalorder %s86, %s87
      %p98 = scmp.eq.s32.totalorder %s22, 0
      %p99 = por %p97, %p98
      %p100 = scmp.ne.s32.totalorder %s86, %s87
      %p101 = scmp.eq.s32.totalorder %s23, 1
      %p102 = por %p100, %p101
      %p104 = scmp.ne.s32.totalorder %s87, %s103
      %p105 = scmp.eq.s32.totalorder %s23, 0
      %p106 = por %p104, %p105
      %s107 = ssub.s32 %s24, %s36
      %s108 = ssub.s32 %s25, %s32
      %s109 = sor.u32 %s107, %s108
      %p110 = scmp.eq.s32.totalorder %s109, 0
      %s112 = sadd.s32 %s111, 1
      %s113 = scalar_select %p110, %s111, %s112
      %p116 = pneg %p110
      %p117 = scmp.eq.s32.totalorder %s17, 1
      %p118 = por %p116, %p117
      %p119 = scmp.ne.s32.totalorder %s111, %s114
      %p120 = scmp.eq.s32.totalorder %s17, 0
      %p121 = por %p119, %p120
      %p122 = scmp.ne.s32.totalorder %s111, %s114
      %p123 = scmp.eq.s32.totalorder %s22, 1
      %p124 = por %p122, %p123
      %p125 = scmp.ne.s32.totalorder %s114, %s115
      %p126 = scmp.eq.s32.totalorder %s22, 0
      %p127 = por %p125, %p126
      %p128 = scmp.ne.s32.totalorder %s114, %s115
      %p129 = scmp.eq.s32.totalorder %s23, 1
      %p130 = por %p128, %p129
      %p132 = scmp.ne.s32.totalorder %s115, %s131
      %p133 = scmp.eq.s32.totalorder %s23, 0
      %p134 = por %p132, %p133
      %p135 = scmp.le.s32.totalorder 1, %s17
      %p136 = scmp.lt.s32.totalorder %s17, 3
      %p137 = pnand %p135, %p136
      %p138 = pneg %p137
      // Predicated region
      $region9: #{tpu_custom_call.1} parent=5 // pred_check
        _
      $region10: #{tpu_custom_call.1} parent=5 // pred_check_branch
        %140 = sbr.rel (%p137) target = $region12
      $region11: #{tpu_custom_call.1} parent=5 // pred_region
        %s141 = ssub.s32 %s17, 1
        // Predicated region
        $region13: #{tpu_custom_call.1} parent=11 // pred_check
          %p142 = pneg %p50
        $region14: #{tpu_custom_call.1} parent=11 // pred_check_branch
          %144 = sbr.rel (%p142) target = $region16
        $region15: #{tpu_custom_call.1} parent=11 // pred_region
          %s146 = ssub.s32 16, 16
          %147 = vsyncadd [#allocation5], %s146
          %150 = dma.hbm_to_smem %s0, 16, [#allocation2], [#allocation5]
        $region16: #{tpu_custom_call.1} parent=11 // pred_fallthru
          _
        // Predicated region
        $region17: #{tpu_custom_call.1} parent=11 // pred_check
          %p151 = pneg %p71
        $region18: #{tpu_custom_call.1} parent=11 // pred_check_branch
          %153 = sbr.rel (%p151) target = $region20
        $region19: #{tpu_custom_call.1} parent=11 // pred_region
          %s155 = ssub.s32 16, 16
          %156 = vsyncadd [#allocation6], %s155
          %s158 = sshll.u32 %s1, 4
          %s159 = int_to_ptr.vmem [resolvable:$true] %s158
          %161 = dma.vmem_to_smem %s159, 16, [#allocation7], [#allocation6]
        $region20: #{tpu_custom_call.1} parent=11 // pred_fallthru
          _
      $region12: #{tpu_custom_call.1} parent=5 // pred_fallthru
        _
      %p162 = scmp.lt.s32.totalorder %s17, 2
      // Predicated region
      $region21: #{tpu_custom_call.1} parent=5 // pred_check
        %p163 = pneg %p162
      $region22: #{tpu_custom_call.1} parent=5 // pred_check_branch
        %165 = sbr.rel (%p163) target = $region24
      $region23: #{tpu_custom_call.1} parent=5 // pred_region
        // Predicated region
        $region25: #{tpu_custom_call.1} parent=23 // pred_check
          %p166 = pneg %p93
        $region26: #{tpu_custom_call.1} parent=23 // pred_check_branch
          %168 = sbr.rel (%p166) target = $region28
        $region27: #{tpu_custom_call.1} parent=23 // pred_region
          %s169 = sand.u32 %s83, 1
          %s170 = scalar_lea.sflag [#allocation3], %s169
          %s171 = sand.u32 %s83, 1
          %s172 = smul.addr %s171, 8
          %s173 = scalar_lea.vmem [#allocation8], %s172
          %s175 = ssub.s32 128, 128
          %176 = vsyncadd %s170, %s175
          %s177 = smul.addr %s24, 4
          %s178 = sadd.s32 %s25, %s177
          %s179 = smul.addr %s178, 32
          %s180 = scalar_lea.hbm %s2, %s179
          %s181 = sshll.u32 %s173, 4
          %s182 = int_to_ptr.vmem [resolvable:$true] %s181
          %187 = dma.hbm_to_vmem [thread:$0]  %s180, 128, %s182, %s170, 32, 32, 2
        $region28: #{tpu_custom_call.1} parent=23 // pred_fallthru
          _
      $region24: #{tpu_custom_call.1} parent=5 // pred_fallthru
        _
      %p188 = scmp.le.s32.totalorder 1, %s17
      %p189 = scmp.lt.s32.totalorder %s17, 3
      %p190 = pnand %p188, %p189
      %p191 = pneg %p190
      // Predicated region
      $region29: #{tpu_custom_call.1} parent=5 // pred_check
        _
      $region30: #{tpu_custom_call.1} parent=5 // pred_check_branch
        %193 = sbr.rel (%p190) target = $region32
      $region31: #{tpu_custom_call.1} parent=5 // pred_region
        %s194 = ssub.s32 %s17, 1
        // Predicated region
        $region33: #{tpu_custom_call.1} parent=31 // pred_check
          %p195 = pneg %p50
        $region34: #{tpu_custom_call.1} parent=31 // pred_check_branch
          %197 = sbr.rel (%p195) target = $region36
        $region35: #{tpu_custom_call.1} parent=31 // pred_region
          %198 = dma.done [#allocation5], 16
        $region36: #{tpu_custom_call.1} parent=31 // pred_fallthru
          _
        // Predicated region
        $region37: #{tpu_custom_call.1} parent=31 // pred_check
          %p199 = pneg %p71
        $region38: #{tpu_custom_call.1} parent=31 // pred_check_branch
          %201 = sbr.rel (%p199) target = $region40
        $region39: #{tpu_custom_call.1} parent=31 // pred_region
          %202 = dma.done [#allocation6], 16
        $region40: #{tpu_custom_call.1} parent=31 // pred_fallthru
          _
        %s203 = sand.u32 %s86, 1
        %s204 = scalar_lea.sflag [#allocation3], %s203
        %s205 = sand.u32 %s86, 1
        %s206 = smul.addr %s205, 8
        %s207 = scalar_lea.vmem [#allocation8], %s206
        // Predicated region
        $region41: #{tpu_custom_call.1} parent=31 // pred_check
          %p208 = pneg %p99
        $region42: #{tpu_custom_call.1} parent=31 // pred_check_branch
          %210 = sbr.rel (%p208) target = $region44
        $region43: #{tpu_custom_call.1} parent=31 // pred_region
          %211 = dma.done %s204, 128
        $region44: #{tpu_custom_call.1} parent=31 // pred_fallthru
          _
        %212 = sfence
        %p213 = pneg %p50
        %p214 = pneg %p47
        %p215 = pneg %p71
        %p216 = pneg %p68
        %s217 = sand.u32 %s86, 1
        %s218 = scalar_lea.sflag [#allocation3], %s217
        %s219 = sand.u32 %s86, 1
        %s220 = smul.addr %s219, 8
        %s221 = scalar_lea.vmem [#allocation8], %s220
        %p222 = pneg %p99
        %p223 = pneg %p96
        %p224 = pneg %p127
        %p225 = pneg %p124
        %s226 = sand.u32 %s114, 1
        %s227 = scalar_lea.sflag [#allocation4], %s226
        %s228 = sand.u32 %s114, 1
        %s229 = smul.addr %s228, 8
        %s230 = scalar_lea.vmem [#allocation9], %s229
        %s231 = sld [smem:[#allocation7]]
        %v232 = vstv %s231
        %s233 = sld [smem:[#allocation7 + $0x1]]
        %v234 = vstv %s233
        %s235 = sld [smem:[#allocation7 + $0x2]]
        %v236 = vstv %s235
        %s237 = sld [smem:[#allocation7 + $0x3]]
        %v238 = vstv %s237
        %v239 = vld [vmem:[%s207] sm:$0x3]
        %s240 = sld [smem:[#allocation2]]
        %v241 = vstv %s240
        %v242 = vmul.f32 %v241, %v239
        %v243 = vadd.f32 %v232, %v242
        %s244 = sld [smem:[#allocation2 + $0x1]]
        %v245 = vstv %s244
        %v246 = vmul.f32 %v245, %v239
        %v247 = vadd.f32 %v234, %v246
        %s248 = sld [smem:[#allocation2 + $0x2]]
        %v249 = vstv %s248
        %v250 = vmul.f32 %v249, %v239
        %v251 = vadd.f32 %v236, %v250
        %s252 = sld [smem:[#allocation2 + $0x3]]
        %v253 = vstv %s252
        %v254 = vmul.f32 %v253, %v239
        %v255 = vadd.f32 %v238, %v254
        %256 = vrot.lane.b32.xlu0 %v239, 127
        %v257 = vpop.permute.xlu0 %256
        %s258 = sld [smem:[#allocation2 + $0x4]]
        %v259 = vstv %s258
        %v260 = vmul.f32 %v259, %v257
        %v261 = vadd.f32 %v243, %v260
        %s262 = sld [smem:[#allocation2 + $0x5]]
        %v263 = vstv %s262
        %v264 = vmul.f32 %v263, %v257
        %v265 = vadd.f32 %v247, %v264
        %s266 = sld [smem:[#allocation2 + $0x6]]
        %v267 = vstv %s266
        %v268 = vmul.f32 %v267, %v257
        %v269 = vadd.f32 %v251, %v268
        %s270 = sld [smem:[#allocation2 + $0x7]]
        %v271 = vstv %s270
        %v272 = vmul.f32 %v271, %v257
        %v273 = vadd.f32 %v255, %v272
        %274 = vrot.lane.b32.xlu0 %v239, 126
        %v275 = vpop.permute.xlu0 %274
        %s276 = sld [smem:[#allocation2 + $0x8]]
        %v277 = vstv %s276
        %v278 = vmul.f32 %v277, %v275
        %v279 = vadd.f32 %v261, %v278
        %s280 = sld [smem:[#allocation2 + $0x9]]
        %v281 = vstv %s280
        %v282 = vmul.f32 %v281, %v275
        %v283 = vadd.f32 %v265, %v282
        %s284 = sld [smem:[#allocation2 + $0xa]]
        %v285 = vstv %s284
        %v286 = vmul.f32 %v285, %v275
        %v287 = vadd.f32 %v269, %v286
        %s288 = sld [smem:[#allocation2 + $0xb]]
        %v289 = vstv %s288
        %v290 = vmul.f32 %v289, %v275
        %v291 = vadd.f32 %v273, %v290
        %s292 = scalar_lea.vmem %s207, 2 [#allocation8]
        %v293 = vld [vmem:[%s292] sm:$0x3]
        %s294 = sld [smem:[#allocation2 + $0xc]]
        %v295 = vstv %s294
        %v296 = vmul.f32 %v295, %v293
        %v297 = vadd.f32 %v279, %v296
        %s298 = sld [smem:[#allocation2 + $0xd]]
        %v299 = vstv %s298
        %v300 = vmul.f32 %v299, %v293
        %v301 = vadd.f32 %v283, %v300
        %s302 = sld [smem:[#allocation2 + $0xe]]
        %v303 = vstv %s302
        %v304 = vmul.f32 %v303, %v293
        %v305 = vadd.f32 %v287, %v304
        %s306 = sld [smem:[#allocation2 + $0xf]]
        %v307 = vstv %s306
        %v308 = vmul.f32 %v307, %v293
        %v309 = vadd.f32 %v291, %v308
        %310 = vrot.lane.b32.xlu0 %v293, 127
        %v311 = vpop.permute.xlu0 %310
        %s312 = sld [smem:[#allocation2 + $0x10]]
        %v313 = vstv %s312
        %v314 = vmul.f32 %v313, %v311
        %v315 = vadd.f32 %v297, %v314
        %s316 = sld [smem:[#allocation2 + $0x11]]
        %v317 = vstv %s316
        %v318 = vmul.f32 %v317, %v311
        %v319 = vadd.f32 %v301, %v318
        %s320 = sld [smem:[#allocation2 + $0x12]]
        %v321 = vstv %s320
        %v322 = vmul.f32 %v321, %v311
        %v323 = vadd.f32 %v305, %v322
        %s324 = sld [smem:[#allocation2 + $0x13]]
        %v325 = vstv %s324
        %v326 = vmul.f32 %v325, %v311
        %v327 = vadd.f32 %v309, %v326
        %328 = vrot.lane.b32.xlu0 %v293, 126
        %v329 = vpop.permute.xlu0 %328
        %s330 = sld [smem:[#allocation2 + $0x14]]
        %v331 = vstv %s330
        %v332 = vmul.f32 %v331, %v329
        %v333 = vadd.f32 %v315, %v332
        %s334 = sld [smem:[#allocation2 + $0x15]]
        %v335 = vstv %s334
        %v336 = vmul.f32 %v335, %v329
        %v337 = vadd.f32 %v319, %v336
        %s338 = sld [smem:[#allocation2 + $0x16]]
        %v339 = vstv %s338
        %v340 = vmul.f32 %v339, %v329
        %v341 = vadd.f32 %v323, %v340
        %s342 = sld [smem:[#allocation2 + $0x17]]
        %v343 = vstv %s342
        %v344 = vmul.f32 %v343, %v329
        %v345 = vadd.f32 %v327, %v344
        %s346 = scalar_lea.vmem %s207, 4 [#allocation8]
        %v347 = vld [vmem:[%s346] sm:$0x3]
        %s348 = sld [smem:[#allocation2 + $0x18]]
        %v349 = vstv %s348
        %v350 = vmul.f32 %v349, %v347
        %v351 = vadd.f32 %v333, %v350
        %s352 = sld [smem:[#allocation2 + $0x19]]
        %v353 = vstv %s352
        %v354 = vmul.f32 %v353, %v347
        %v355 = vadd.f32 %v337, %v354
        %s356 = sld [smem:[#allocation2 + $0x1a]]
        %v357 = vstv %s356
        %v358 = vmul.f32 %v357, %v347
        %v359 = vadd.f32 %v341, %v358
        %s360 = sld [smem:[#allocation2 + $0x1b]]
        %v361 = vstv %s360
        %v362 = vmul.f32 %v361, %v347
        %v363 = vadd.f32 %v345, %v362
        %364 = vrot.lane.b32.xlu0 %v347, 127
        %v365 = vpop.permute.xlu0 %364
        %s366 = sld [smem:[#allocation2 + $0x1c]]
        %v367 = vstv %s366
        %v368 = vmul.f32 %v367, %v365
        %v369 = vadd.f32 %v351, %v368
        %s370 = sld [smem:[#allocation2 + $0x1d]]
        %v371 = vstv %s370
        %v372 = vmul.f32 %v371, %v365
        %v373 = vadd.f32 %v355, %v372
        %s374 = sld [smem:[#allocation2 + $0x1e]]
        %v375 = vstv %s374
        %v376 = vmul.f32 %v375, %v365
        %v377 = vadd.f32 %v359, %v376
        %s378 = sld [smem:[#allocation2 + $0x1f]]
        %v379 = vstv %s378
        %v380 = vmul.f32 %v379, %v365
        %v381 = vadd.f32 %v363, %v380
        %382 = vrot.lane.b32.xlu0 %v347, 126
        %v383 = vpop.permute.xlu0 %382
        %s384 = sld [smem:[#allocation2 + $0x20]]
        %v385 = vstv %s384
        %v386 = vmul.f32 %v385, %v383
        %v387 = vadd.f32 %v369, %v386
        %s388 = sld [smem:[#allocation2 + $0x21]]
        %v389 = vstv %s388
        %v390 = vmul.f32 %v389, %v383
        %v391 = vadd.f32 %v373, %v390
        %s392 = sld [smem:[#allocation2 + $0x22]]
        %v393 = vstv %s392
        %v394 = vmul.f32 %v393, %v383
        %v395 = vadd.f32 %v377, %v394
        %s396 = sld [smem:[#allocation2 + $0x23]]
        %v397 = vstv %s396
        %v398 = vmul.f32 %v397, %v383
        %v399 = vadd.f32 %v381, %v398
        %s400 = scalar_lea.vmem %s207, 6 [#allocation8]
        %v401 = vld [vmem:[%s400] sm:$0x3]
        %s402 = sld [smem:[#allocation2 + $0x24]]
        %v403 = vstv %s402
        %v404 = vmul.f32 %v403, %v401
        %v405 = vadd.f32 %v387, %v404
        %s406 = sld [smem:[#allocation2 + $0x25]]
        %v407 = vstv %s406
        %v408 = vmul.f32 %v407, %v401
        %v409 = vadd.f32 %v391, %v408
        %s410 = sld [smem:[#allocation2 + $0x26]]
        %v411 = vstv %s410
        %v412 = vmul.f32 %v411, %v401
        %v413 = vadd.f32 %v395, %v412
        %s414 = sld [smem:[#allocation2 + $0x27]]
        %v415 = vstv %s414
        %v416 = vmul.f32 %v415, %v401
        %v417 = vadd.f32 %v399, %v416
        %418 = vrot.lane.b32.xlu0 %v401, 127
        %v419 = vpop.permute.xlu0 %418
        %s420 = sld [smem:[#allocation2 + $0x28]]
        %v421 = vstv %s420
        %v422 = vmul.f32 %v421, %v419
        %v423 = vadd.f32 %v405, %v422
        %s424 = sld [smem:[#allocation2 + $0x29]]
        %v425 = vstv %s424
        %v426 = vmul.f32 %v425, %v419
        %v427 = vadd.f32 %v409, %v426
        %s428 = sld [smem:[#allocation2 + $0x2a]]
        %v429 = vstv %s428
        %v430 = vmul.f32 %v429, %v419
        %v431 = vadd.f32 %v413, %v430
        %s432 = sld [smem:[#allocation2 + $0x2b]]
        %v433 = vstv %s432
        %v434 = vmul.f32 %v433, %v419
        %v435 = vadd.f32 %v417, %v434
        %436 = vrot.lane.b32.xlu0 %v401, 126
        %v437 = vpop.permute.xlu0 %436
        %s438 = sld [smem:[#allocation2 + $0x2c]]
        %v439 = vstv %s438
        %v440 = vmul.f32 %v439, %v437
        %v441 = vadd.f32 %v423, %v440
        %s442 = sld [smem:[#allocation2 + $0x2d]]
        %v443 = vstv %s442
        %v444 = vmul.f32 %v443, %v437
        %v445 = vadd.f32 %v427, %v444
        %s446 = sld [smem:[#allocation2 + $0x2e]]
        %v447 = vstv %s446
        %v448 = vmul.f32 %v447, %v437
        %v449 = vadd.f32 %v431, %v448
        %s450 = sld [smem:[#allocation2 + $0x2f]]
        %v451 = vstv %s450
        %v452 = vmul.f32 %v451, %v437
        %v453 = vadd.f32 %v435, %v452
        %454 = vst [vmem:[%s230] sm:$0x3] %v441
        %s455 = scalar_lea.vmem %s230, 2 [#allocation9]
        %456 = vst [vmem:[%s455] sm:$0x3] %v445
        %s457 = scalar_lea.vmem %s230, 4 [#allocation9]
        %458 = vst [vmem:[%s457] sm:$0x3] %v449
        %s459 = scalar_lea.vmem %s230, 6 [#allocation9]
        %460 = vst [vmem:[%s459] sm:$0x3] %v453
        %s461 = sand.u32 %s114, 1
        %s462 = scalar_lea.sflag [#allocation4], %s461
        %s463 = sand.u32 %s114, 1
        %s464 = smul.addr %s463, 8
        %s465 = scalar_lea.vmem [#allocation9], %s464
        // Predicated region
        $region45: #{tpu_custom_call.1} parent=31 // pred_check
          %p466 = pneg %p124
        $region46: #{tpu_custom_call.1} parent=31 // pred_check_branch
          %468 = sbr.rel (%p466) target = $region48
        $region47: #{tpu_custom_call.1} parent=31 // pred_region
          %s470 = ssub.s32 128, 128
          %471 = vsyncadd %s462, %s470
          %s472 = smul.addr %s26, 4
          %s473 = sadd.s32 %s27, %s472
          %s474 = smul.addr %s473, 32
          %s475 = scalar_lea.hbm %s3, %s474
          %s476 = sshll.u32 %s465, 4
          %s477 = int_to_ptr.vmem [resolvable:$true] %s476
          %482 = dma.vmem_to_hbm [thread:$0]  %s477, 128, %s475, %s462, 32, 32, 2
        $region48: #{tpu_custom_call.1} parent=31 // pred_fallthru
          _
      $region32: #{tpu_custom_call.1} parent=5 // pred_fallthru
        _
      %p483 = scmp.le.s32.totalorder 2, %s17
      // Predicated region
      $region49: #{tpu_custom_call.1} parent=5 // pred_check
        %p484 = pneg %p483
      $region50: #{tpu_custom_call.1} parent=5 // pred_check_branch
        %486 = sbr.rel (%p484) target = $region52
      $region51: #{tpu_custom_call.1} parent=5 // pred_region
        %s487 = ssub.s32 %s17, 2
        // Predicated region
        $region53: #{tpu_custom_call.1} parent=51 // pred_check
          %p488 = pneg %p130
        $region54: #{tpu_custom_call.1} parent=51 // pred_check_branch
          %490 = sbr.rel (%p488) target = $region56
        $region55: #{tpu_custom_call.1} parent=51 // pred_region
          %s491 = sand.u32 %s115, 1
          %s492 = scalar_lea.sflag [#allocation4], %s491
          %s493 = sand.u32 %s115, 1
          %s494 = smul.addr %s493, 8
          %s495 = scalar_lea.vmem [#allocation9], %s494
          %496 = dma.done %s492, 128
        $region56: #{tpu_custom_call.1} parent=51 // pred_fallthru
          _
      $region52: #{tpu_custom_call.1} parent=5 // pred_fallthru
        _
    $region6: #{tpu_custom_call.1} parent=1 // loop_footer
      %s21 = sadd.s32 1, %s17
    $region7: #{tpu_custom_call.1} parent=1 // loop_footer_branch
      %16 = sbr.rel target = $region3
    $region8: #{tpu_custom_call.1} parent=1 // loop_exit
      _
    %497 = vsyncpa [#allocation3], 1
    %s498 = scalar_lea.sflag [#allocation3], 1
    %499 = vsyncpa %s498, 1
    %500 = vsyncpa [#allocation4], 1
    %s501 = scalar_lea.sflag [#allocation4], 1
    %502 = vsyncpa %s501, 1
    %503 = vsyncpa [#allocation5], 1
    %s504 = scalar_lea.sflag [#allocation5], 1
    %505 = vsyncpa %s504, 1
    %506 = vsyncpa [#allocation6], 1
    %s507 = scalar_lea.sflag [#allocation6], 1
    %508 = vsyncpa %s507, 1

</llo_original>
